<compile_context>
chip_gen: v5e
topology: v5e:2x2
jax: 0.10.0
libtpu: 0.0.40
codegen_flags: <defaults>
</compile_context>

<pallas_src>
import math

import jax
import jax.numpy as jnp
from jax.experimental import pallas as pl
from jax.experimental.pallas import tpu as pltpu

# ---------------- synthetic module_cfg ------------------------------------
CFG = dict(
    c_s=32,
    c_pos_emb=32,
    c_timestep_emb=32,
    c_fixedmask_emb=16,
    c_SS_emb=16,
    c_AA_emb=16,
    c_Chi_emb=16,
    c_bfactor_emb=16,
    max_bf=60.0,
)
AA_PC_DIM = 8                  # synthetic width of the AAindex1 physchem table
BF_INTERVALS = [15, 30, 45, 60]
PACK = 4                       # rows packed per GEMM row -> 4*c_s = 128 output lanes


def _round_up(x, m):
    return ((x + m - 1) // m) * m


# ---------------- sinusoidal embeddings (glue, plain JAX) -------------------
def get_index_embedding(indices, embed_size, max_len):
    k = jnp.arange(embed_size // 2, dtype=jnp.float32)
    denom = max_len ** (2.0 * k / embed_size)
    arg = indices[..., None].astype(jnp.float32) * math.pi / denom
    return jnp.concatenate([jnp.sin(arg), jnp.cos(arg)], axis=-1)


def get_time_embedding(timesteps, embedding_dim, max_positions):
    t = timesteps.astype(jnp.float32) * max_positions
    half = embedding_dim // 2
    scale = math.log(max_positions) / (half - 1)
    freqs = jnp.exp(-scale * jnp.arange(half, dtype=jnp.float32))
    emb = t[:, None] * freqs[None, :]
    return jnp.concatenate([jnp.sin(emb), jnp.cos(emb)], axis=-1)


# ---------------- the Pallas kernel: one fused lane-dense GEMM per row tile --
def fused_node_embed_kernel(x_ref, w_ref, b_ref, bf_ref, o_ref):
    # x_ref:  [TILE4, 512]  bf16 packed features (4 original rows per GEMM row)
    # w_ref:  [512, 128]    bf16 block-diagonal folded weights (resident)
    # b_ref:  [1, 128]      f32 tiled final bias (resident)
    # bf_ref: [TILE4, 128]  f32 pre-folded b-factor contribution
    # o_ref:  [TILE4, 128]  f32 output (4 original rows per row)
    o_ref[...] = (jnp.dot(x_ref[...], w_ref[...],
                          preferred_element_type=jnp.float32)
                  + b_ref[...] + bf_ref[...])


# ---------------- wrapper ---------------------------------------------------
def node_embedder_forward(params, timesteps, mask, fixed_mask, res_idx, ss,
                          aatype, chi, mask_chi, atoms14_b_factors,
                          is_training=True):
    cfg = CFG
    c_s = cfg['c_s']
    B, N = mask.shape
    f32 = jnp.float32
    mask_f = mask.astype(f32)[..., None]          # [B,N,1]
    fm_f = fixed_mask.astype(f32)[..., None]      # [B,N,1]
    fm_scale = fm_f if is_training else jnp.ones_like(fm_f)

    # ----- glue: gathers, sinusoids, featurisation, masking, time mix -----
    pos = get_index_embedding(res_idx.astype(f32), cfg['c_pos_emb'], 2056) * mask_f
    ss_e = params['ss_embed'][ss]                                      # [B,N,16]
    seq_cat = jnp.concatenate([params['seq_embed'][aatype],
                               params['aatype_pc'][aatype]], -1) * fm_scale
    chi_f = chi.astype(f32)
    mchi = mask_chi.astype(f32)
    chi_sc = jnp.concatenate([jnp.sin(chi_f) * mchi,
                              jnp.cos(chi_f) * mchi], -1) * fm_scale   # [B,N,8]
    t_raw = get_time_embedding(timesteps[:, 0], cfg['c_timestep_emb'], 2056)[:, None, :]
    mt_raw = get_time_embedding(jnp.ones_like(timesteps)[:, 0],
                                cfg['c_timestep_emb'], 2056)[:, None, :]
    time_mix = (t_raw * (1.0 - fm_f) + mt_raw * fm_f) * mask_f         # [B,N,32]
    fm_emb = get_index_embedding(fixed_mask.astype(f32), cfg['c_fixedmask_emb'], 2)

    # ----- offline weight folding (exact: bias-free inner linears) -----
    w_final_T = params['w_final'].T                                    # [144, c_s]
    segs = [cfg['c_pos_emb'], cfg['c_SS_emb'], cfg['c_AA_emb'], cfg['c_Chi_emb'],
            cfg['c_bfactor_emb'], cfg['c_timestep_emb'], cfg['c_fixedmask_emb']]
    offs = [0]
    for s in segs:
        offs.append(offs[-1] + s)
    wp, wss, wsq, wch, wbf, wt, wfm = (
        w_final_T[offs[i]:offs[i + 1]] for i in range(7))

    # --- b-factor path folded out of the GEMM: tiny tables, host-side gathers
    M = params['w_bf_linear'].T @ wbf                                  # [320, c_s]
    v_native = params['w_bf_native'].T @ M[:64]                        # [1, c_s]
    b_factor = atoms14_b_factors[..., :, 1].astype(f32)                # [B,N]
    bf_contrib = b_factor[..., None] * v_native[0]                     # [B,N,c_s]
    for i, th in enumerate(BF_INTERVALS):
        n_int = int(cfg['max_bf'] // th)
        idx = jnp.floor(b_factor / th).astype(jnp.int32)
        idx = jnp.where(idx >= n_int, n_int, idx)
        tbl = params[f'bf_embed_{th}'] @ M[64 * (i + 1):64 * (i + 2)]  # [n_int+1, c_s]
        bf_contrib = bf_contrib + tbl[idx]
    bf_contrib = bf_contrib * fm_scale                                 # [B,N,c_s] f32

    # --- remaining segments folded into one [128, c_s] matrix (row order = X)
    W_big = jnp.concatenate([
        wp,                               # pos   [32, c_s]
        wss,                              # ss    [16, c_s]
        params['w_seq'].T @ wsq,          # seq   [24, c_s]
        params['w_chi'].T @ wch,          # chi   [ 8, c_s]
        wt,                               # time  [32, c_s]
        wfm,                              # fm    [16, c_s]
    ], axis=0)                            # -> [128, c_s]
    bias = params['b_final']

    # Packed feature tensor (channel order matches W_big rows) — exactly 128 wide.
    X = jnp.concatenate([pos, ss_e, seq_cat, chi_sc, time_mix, fm_emb], axis=-1)
    D = X.shape[-1]
    assert D == PACK * c_s == 128, "packed feature width must be 128"

    # ----- row packing / tiling ------------------------------------------------
    rows = B * N
    R4 = -(-rows // PACK)                       # packed rows needed
    R4_al = _round_up(max(R4, 1), 8)            # sublane aligned
    TILE4 = min(512, R4_al)                     # up to 2048 original rows / step
    if TILE4 == R4_al and R4_al >= 16:          # guarantee >=2 grid steps (v7x: 2 TCs)
        TILE4 = _round_up(R4_al // 2, 8)
    R4_pad = _round_up(R4_al, TILE4)
    rows_pad = R4_pad * PACK

    # bf16 X stream; padded rows stay exactly zero so they produce bias-only rows.
    Xf = jnp.pad(X.reshape(rows, D).astype(jnp.bfloat16),
                 ((0, rows_pad - rows), (0, 0)))
    X4 = Xf.reshape(R4_pad, PACK * D)                                   # [R4_pad, 512]
    bf_f = jnp.pad(bf_contrib.reshape(rows, c_s),
                   ((0, rows_pad - rows), (0, 0)))
    bf4 = bf_f.reshape(R4_pad, PACK * c_s)                              # [R4_pad, 128]
    # block-diagonal folded weights -> lane-dense 128-wide output, no in-kernel relayout
    W4 = jnp.kron(jnp.eye(PACK, dtype=f32), W_big).astype(jnp.bfloat16)  # [512, 128]
    b4 = jnp.tile(bias, PACK)[None, :]                                  # [1, 128]

    grid = (R4_pad // TILE4,)
    out4 = pl.pallas_call(
        fused_node_embed_kernel,
        out_shape=jax.ShapeDtypeStruct((R4_pad, PACK * c_s), f32),
        grid=grid,
        in_specs=[
            pl.BlockSpec((TILE4, PACK * D), lambda i: (i, 0)),
            pl.BlockSpec((PACK * D, PACK * c_s), lambda i: (0, 0)),
            pl.BlockSpec((1, PACK * c_s), lambda i: (0, 0)),
            pl.BlockSpec((TILE4, PACK * c_s), lambda i: (i, 0)),
        ],
        out_specs=pl.BlockSpec((TILE4, PACK * c_s), lambda i: (i, 0)),
        compiler_params=pltpu.CompilerParams(
            dimension_semantics=("parallel",),
            vmem_limit_bytes=32 * 1024 * 1024),
    )(X4, W4, b4, bf4)
    return out4.reshape(rows_pad, c_s)[:rows].reshape(B, N, c_s)


# ---------------- pure-JAX reference (mirrors the PyTorch forward) ----------
def ref_forward(params, timesteps, mask, fixed_mask, res_idx, ss, aatype,
                chi, mask_chi, atoms14_b_factors, is_training=True):
    cfg = CFG
    f32 = jnp.float32
    mask_f = mask.astype(f32)[..., None]
    fm = fixed_mask.astype(f32)[..., None]
    pos_emb = get_index_embedding(res_idx.astype(f32), cfg['c_pos_emb'], 2056) * mask_f
    ss_emb = params['ss_embed'][ss]
    seq_emb = jnp.concatenate([params['seq_embed'][aatype],
                               params['aatype_pc'][aatype]], -1) @ params['w_seq'].T
    chi_feat = jnp.concatenate([jnp.sin(chi) * mask_chi, jnp.cos(chi) * mask_chi], -1)
    chi_emb = chi_feat @ params['w_chi'].T
    b_factor = atoms14_b_factors[..., :, 1].astype(f32)
    bf = [b_factor[..., None] @ params['w_bf_native'].T]
    for th in BF_INTERVALS:
        num_intervals = int(cfg['max_bf'] // th)
        idx = jnp.floor(b_factor / th).astype(jnp.int32)
        idx = jnp.where(idx >= num_intervals, num_intervals, idx)
        bf.append(params[f'bf_embed_{th}'][idx])
    bf_emb = jnp.concatenate(bf, -1) @ params['w_bf_linear'].T
    if is_training:
        seq_emb, chi_emb, bf_emb = seq_emb * fm, chi_emb * fm, bf_emb * fm
    t_emb = get_time_embedding(timesteps[:, 0], cfg['c_timestep_emb'], 2056)[:, None, :] * mask_f
    mt_emb = get_time_embedding(jnp.ones_like(timesteps)[:, 0],
                                cfg['c_timestep_emb'], 2056)[:, None, :] * mask_f
    time_emb = t_emb * (1.0 - fm) + mt_emb * fm
    fm_emb = get_index_embedding(fixed_mask.astype(f32), cfg['c_fixedmask_emb'], 2)
    x = jnp.concatenate([pos_emb, ss_emb, seq_emb, chi_emb, bf_emb, time_emb, fm_emb], -1)
    return x @ params['w_final'].T + params['b_final']


# ---------------- main ------------------------------------------------------
if __name__ == "__main__":
    cfg = CFG
    B, N = 2, 8
    key = jax.random.PRNGKey(0)
    keys = jax.random.split(key, 16)

    def init(k, shape, scale=0.1):
        return scale * jax.random.normal(k, shape, dtype=jnp.float32)

    d_total = (cfg['c_pos_emb'] + cfg['c_SS_emb'] + cfg['c_AA_emb'] +
               cfg['c_Chi_emb'] + cfg['c_bfactor_emb'] + cfg['c_timestep_emb'] +
               cfg['c_fixedmask_emb'])
    params = {
        'ss_embed': init(keys[0], (4, cfg['c_SS_emb'])),
        'seq_embed': init(keys[1], (21, cfg['c_AA_emb'])),
        'aatype_pc': init(keys[2], (21, AA_PC_DIM)),
        'w_seq': init(keys[3], (cfg['c_AA_emb'], cfg['c_AA_emb'] + AA_PC_DIM)),
        'w_chi': init(keys[4], (cfg['c_Chi_emb'], 8)),
        'w_bf_native': init(keys[5], (64, 1)),
        'w_bf_linear': init(keys[6], (cfg['c_bfactor_emb'], 64 * (len(BF_INTERVALS) + 1))),
        'w_final': init(keys[7], (cfg['c_s'], d_total)),
        'b_final': init(keys[8], (cfg['c_s'],)),
    }
    for i, th in enumerate(BF_INTERVALS):
        params[f'bf_embed_{th}'] = init(keys[9 + i], (int(cfg['max_bf'] // th) + 1, 64))

    dkeys = jax.random.split(keys[15], 8)
    timesteps = jax.random.uniform(dkeys[0], (B, 1), dtype=jnp.float32)
    mask = jnp.ones((B, N), dtype=jnp.float32).at[1, -2:].set(0.0)
    fixed_mask = (jax.random.uniform(dkeys[1], (B, N)) > 0.5).astype(jnp.float32)
    res_idx = jnp.tile(jnp.arange(N, dtype=jnp.int32)[None, :], (B, 1))
    ss = jax.random.randint(dkeys[2], (B, N), 0, 4)
    aatype = jax.random.randint(dkeys[3], (B, N), 0, 21)
    chi = jax.random.uniform(dkeys[4], (B, N, 4), minval=-math.pi, maxval=math.pi)
    mask_chi = (jax.random.uniform(dkeys[5], (B, N, 4)) > 0.3).astype(jnp.float32)
    atoms14_b_factors = jax.random.uniform(dkeys[6], (B, N, 14),
                                           minval=0.0, maxval=80.0)

    out = node_embedder_forward(params, timesteps, mask, fixed_mask, res_idx, ss,
                                aatype, chi, mask_chi, atoms14_b_factors,
                                is_training=True)
    out = jax.block_until_ready(out)
    ref = ref_forward(params, timesteps, mask, fixed_mask, res_idx, ss,
                      aatype, chi, mask_chi, atoms14_b_factors, is_training=True)
    assert out.shape == (B, N, cfg['c_s'])
    # bf16 GEMM inputs (f32 accumulation) -> relative tolerance, per perf review.
    err = float(jnp.max(jnp.abs(out - ref)))
    scale = float(jnp.max(jnp.abs(ref)))
    assert err <= 2.5e-2 * max(scale, 1.0), f"mismatch vs reference: abs {err}, ref scale {scale}"
    print("KERNEL_OK")
</pallas_src>

<mosaic_0001>
module attributes {stable_mosaic.version = 11 : i64} {
  func.func @fused_node_embed_kernel(%arg0: i32, %arg1: memref<8x512xbf16, #tpu.memory_space<vmem>>, %arg2: memref<512x128xbf16, #tpu.memory_space<vmem>>, %arg3: memref<1x128xf32, #tpu.memory_space<vmem>>, %arg4: memref<8x128xf32, #tpu.memory_space<vmem>>, %arg5: memref<8x128xf32, #tpu.memory_space<vmem>>) attributes {dimension_semantics = [#tpu.dimension_semantics<parallel>], iteration_bounds = array<i64: 1>, scalar_prefetch = 0 : i64, scratch_operands = 0 : i64, tpu.core_type = #tpu.core_type<tc>, window_params = [{transform_indices = @transform_0, window_bounds = array<i64: 8, 512>}, {pipeline_mode = #tpu.pipeline_mode<synchronous>, transform_indices = @transform_1, window_bounds = array<i64: 512, 128>}, {pipeline_mode = #tpu.pipeline_mode<synchronous>, transform_indices = @transform_2, window_bounds = array<i64: 1, 128>}, {transform_indices = @transform_3, window_bounds = array<i64: 8, 128>}, {transform_indices = @transform_4, window_bounds = array<i64: 8, 128>}]} {
    %c0 = arith.constant 0 : index
    %c0_0 = arith.constant 0 : index
    %0 = vector.load %arg1[%c0, %c0_0] : memref<8x512xbf16, #tpu.memory_space<vmem>>, vector<8x512xbf16>
    %c0_1 = arith.constant 0 : index
    %c0_2 = arith.constant 0 : index
    %1 = vector.load %arg2[%c0_1, %c0_2] : memref<512x128xbf16, #tpu.memory_space<vmem>>, vector<512x128xbf16>
    %cst = arith.constant dense<0.000000e+00> : vector<8x128xf32>
    %2 = tpu.matmul %0, %1, %cst {dimension_numbers = #tpu.dot_dimension_numbers<[1], [0], [0], [1], [0, 0, 1, 1], [], []>} : vector<8x512xbf16>, vector<512x128xbf16>, vector<8x128xf32> -> vector<8x128xf32>
    %c0_3 = arith.constant 0 : index
    %c0_4 = arith.constant 0 : index
    %3 = vector.load %arg3[%c0_3, %c0_4] : memref<1x128xf32, #tpu.memory_space<vmem>>, vector<1x128xf32>
    %4 = vector.broadcast %3 : vector<1x128xf32> to vector<8x128xf32>
    %5 = arith.addf %2, %4 : vector<8x128xf32>
    %c0_5 = arith.constant 0 : index
    %c0_6 = arith.constant 0 : index
    %6 = vector.load %arg4[%c0_5, %c0_6] : memref<8x128xf32, #tpu.memory_space<vmem>>, vector<8x128xf32>
    %7 = arith.addf %5, %6 : vector<8x128xf32>
    %c0_7 = arith.constant 0 : index
    %c0_8 = arith.constant 0 : index
    %8 = vector.load %arg5[%c0_7, %c0_8] : memref<8x128xf32, #tpu.memory_space<vmem>>, vector<8x128xf32>
    tpu.vector_store %arg5[%c0_7, %c0_8], %7 {strides = array<i32>} : memref<8x128xf32, #tpu.memory_space<vmem>>, vector<8x128xf32>,
    return
  }
  func.func @transform_0(%arg0: i32) -> (i32, i32) {
    %c0_i32 = arith.constant 0 : i32
    %c0_i32_0 = arith.constant 0 : i32
    return %arg0, %c0_i32 : i32, i32
  }
  func.func @transform_1(%arg0: i32) -> (i32, i32) {
    %c0_i32 = arith.constant 0 : i32
    %c0_i32_0 = arith.constant 0 : i32
    %c0_i32_1 = arith.constant 0 : i32
    return %c0_i32, %c0_i32_0 : i32, i32
  }
  func.func @transform_2(%arg0: i32) -> (i32, i32) {
    %c0_i32 = arith.constant 0 : i32
    %c0_i32_0 = arith.constant 0 : i32
    %c0_i32_1 = arith.constant 0 : i32
    return %c0_i32, %c0_i32_0 : i32, i32
  }
  func.func @transform_3(%arg0: i32) -> (i32, i32) {
    %c0_i32 = arith.constant 0 : i32
    %c0_i32_0 = arith.constant 0 : i32
    return %arg0, %c0_i32 : i32, i32
  }
  func.func @transform_4(%arg0: i32) -> (i32, i32) {
    %c0_i32 = arith.constant 0 : i32
    %c0_i32_0 = arith.constant 0 : i32
    return %arg0, %c0_i32 : i32, i32
  }
}

</mosaic_0001>

<llo_original>
// kernel: tpu_custom_call.1
$region0: #{tpu_custom_call.1}
  #allocation0 [shape = 'u32[]', space=smem, size = 0x4, offset = 0x4, fixed_abs, tag = 'smem constant byte address 0x4 - core index']
  #allocation1 [shape = 'u32[72,128]{1,0:T(1,128)}', space=vmem, size = 0x9000, scoped, tag = 'internal scratch']
  %s0 = inlined_call_operand.hbm [shape: bf16[8,512], index: 0, kind: input, shape index: {}]
  %s1 = inlined_call_operand.hbm [shape: bf16[512,128], index: 1, kind: input, shape index: {}]
  %s2 = inlined_call_operand.vmem [shape: f32[1,128], index: 2, kind: input, shape index: {}]
  %s3 = inlined_call_operand.hbm [shape: f32[8,128], index: 3, kind: input, shape index: {}]
  %s4 = inlined_call_operand.hbm [shape: f32[8,128], index: 4, kind: output, shape index: {}]
  %s5 = sld [smem:[#allocation0]]
  $region38: #{tpu_custom_call.1} parent=0
    _
  %s7 = ssub.s32 1, %s5
  %s8 = scalar_select 0, %s7, %s5
  $region1: #{tpu_custom_call.1} parent=0
    #allocation2 [shape = 'u8[8192]{0}', space=vmem, size = 0x2000, scoped, tag = 'input window, operand 0, single buffered']
    #allocation3 [shape = 's32[1]{0}', space=sflag, size = 0x4, scoped, tag = 'scoped memory for tpu_custom_call.1']
    #allocation4 [shape = 's32[1]{0}', space=sflag, size = 0x4, scoped, tag = 'scoped memory for tpu_custom_call.1']
    #allocation5 [shape = 'u8[131072]{0}', space=vmem, size = 0x20000, scoped, tag = 'input window, operand 1, single buffered']
    #allocation6 [shape = 's32[1]{0}', space=sflag, size = 0x4, scoped, tag = 'scoped memory for tpu_custom_call.1']
    #allocation7 [shape = 'u8[4096]{0}', space=vmem, size = 0x1000, scoped, tag = 'input window, operand 3, single buffered']
    #allocation8 [shape = 'u8[4096]{0}', space=vmem, size = 0x1000, scoped, tag = 'output window, operand 0, single buffered']
    %9 = vsyncpa [#allocation3], 0
    %10 = vsyncpa [#allocation6], 0
    %11 = vsyncpa [#allocation4], 0
    // Predicated region
    $region2: #{tpu_custom_call.1} parent=1 // pred_check
      _
    $region3: #{tpu_custom_call.1} parent=1 // pred_check_branch
      %13 = sbr.rel (0) target = $region5
    $region4: #{tpu_custom_call.1} parent=1 // pred_region
      %15 = vsyncadd [#allocation3], 0
      %s17 = sshll.u32 %s0, 4
      %s18 = int_to_ptr.hbm [resolvable:$true] %s17
      %s19 = sshll.u32 [#allocation2], 4
      %s20 = int_to_ptr.vmem [resolvable:$true] %s19
      %22 = dma.hbm_to_vmem [thread:$0]  %s18, 256, %s20, [#allocation3]
    $region5: #{tpu_custom_call.1} parent=1 // pred_fallthru
      _
    // Predicated region
    $region6: #{tpu_custom_call.1} parent=1 // pred_check
      _
    $region7: #{tpu_custom_call.1} parent=1 // pred_check_branch
      %24 = sbr.rel (0) target = $region9
    $region8: #{tpu_custom_call.1} parent=1 // pred_region
      %26 = vsyncadd [#allocation6], 0
      %s27 = sshll.u32 %s1, 4
      %s28 = int_to_ptr.hbm [resolvable:$true] %s27
      %s29 = sshll.u32 [#allocation5], 4
      %s30 = int_to_ptr.vmem [resolvable:$true] %s29
      %35 = dma.hbm_to_vmem [thread:$0]  %s28, 4096, %s30, [#allocation6], 64, 64, 4
    $region9: #{tpu_custom_call.1} parent=1 // pred_fallthru
      _
    // Predicated region
    $region10: #{tpu_custom_call.1} parent=1 // pred_check
      _
    $region11: #{tpu_custom_call.1} parent=1 // pred_check_branch
      %37 = sbr.rel (0) target = $region13
    $region12: #{tpu_custom_call.1} parent=1 // pred_region
      _
    $region13: #{tpu_custom_call.1} parent=1 // pred_fallthru
      _
    // Predicated region
    $region14: #{tpu_custom_call.1} parent=1 // pred_check
      _
    $region15: #{tpu_custom_call.1} parent=1 // pred_check_branch
      %39 = sbr.rel (0) target = $region17
    $region16: #{tpu_custom_call.1} parent=1 // pred_region
      %41 = vsyncadd [#allocation6], 0
      %s43 = sshll.u32 %s3, 4
      %s44 = int_to_ptr.hbm [resolvable:$true] %s43
      %s45 = sshll.u32 [#allocation7], 4
      %s46 = int_to_ptr.vmem [resolvable:$true] %s45
      %48 = dma.hbm_to_vmem [thread:$0]  %s44, 128, %s46, [#allocation6]
    $region17: #{tpu_custom_call.1} parent=1 // pred_fallthru
      _
    // Predicated region
    $region18: #{tpu_custom_call.1} parent=1 // pred_check
      _
    $region19: #{tpu_custom_call.1} parent=1 // pred_check_branch
      %50 = sbr.rel (0) target = $region21
    $region20: #{tpu_custom_call.1} parent=1 // pred_region
      %52 = dma.done [#allocation3], 256
    $region21: #{tpu_custom_call.1} parent=1 // pred_fallthru
      _
    // Predicated region
    $region22: #{tpu_custom_call.1} parent=1 // pred_check
      _
    $region23: #{tpu_custom_call.1} parent=1 // pred_check_branch
      %54 = sbr.rel (0) target = $region25
    $region24: #{tpu_custom_call.1} parent=1 // pred_region
      %56 = dma.done [#allocation6], 4096
    $region25: #{tpu_custom_call.1} parent=1 // pred_fallthru
      _
    // Predicated region
    $region26: #{tpu_custom_call.1} parent=1 // pred_check
      _
    $region27: #{tpu_custom_call.1} parent=1 // pred_check_branch
      %58 = sbr.rel (0) target = $region29
    $region28: #{tpu_custom_call.1} parent=1 // pred_region
      %60 = dma.done [#allocation6], 128
    $region29: #{tpu_custom_call.1} parent=1 // pred_fallthru
      _
    %v61 = vld [vmem:[#allocation2] sm:$0xff]
    %v62 = vld [vmem:[#allocation2 + $0x8] sm:$0xff]
    %v63 = vld [vmem:[#allocation5] sm:$0xf]
    %v64 = vld [vmem:[#allocation5 + $0x4] sm:$0xf]
    %v65 = vld [vmem:[#allocation5 + $0x8] sm:$0xf]
    %v66 = vld [vmem:[#allocation5 + $0xc] sm:$0xf]
    %v67 = vld [vmem:[#allocation5 + $0x10] sm:$0xf]
    %v68 = vld [vmem:[#allocation5 + $0x14] sm:$0xf]
    %v69 = vld [vmem:[#allocation5 + $0x18] sm:$0xf]
    %v70 = vld [vmem:[#allocation5 + $0x1c] sm:$0xf]
    %v71 = vld [vmem:[#allocation5 + $0x20] sm:$0xf]
    %v72 = vld [vmem:[#allocation5 + $0x24] sm:$0xf]
    %v73 = vld [vmem:[#allocation5 + $0x28] sm:$0xf]
    %v74 = vld [vmem:[#allocation5 + $0x2c] sm:$0xf]
    %v75 = vld [vmem:[#allocation5 + $0x30] sm:$0xf]
    %v76 = vld [vmem:[#allocation5 + $0x34] sm:$0xf]
    %v77 = vld [vmem:[#allocation5 + $0x38] sm:$0xf]
    %v78 = vld [vmem:[#allocation5 + $0x3c] sm:$0xf]
    %v79 = vld [vmem:[#allocation5 + $0x40] sm:$0xf]
    %v80 = vld [vmem:[#allocation5 + $0x44] sm:$0xf]
    %v81 = vld [vmem:[#allocation5 + $0x48] sm:$0xf]
    %v82 = vld [vmem:[#allocation5 + $0x4c] sm:$0xf]
    %v83 = vld [vmem:[#allocation5 + $0x50] sm:$0xf]
    %v84 = vld [vmem:[#allocation5 + $0x54] sm:$0xf]
    %v85 = vld [vmem:[#allocation5 + $0x58] sm:$0xf]
    %v86 = vld [vmem:[#allocation5 + $0x5c] sm:$0xf]
    %v87 = vld [vmem:[#allocation5 + $0x60] sm:$0xf]
    %v88 = vld [vmem:[#allocation5 + $0x64] sm:$0xf]
    %v89 = vld [vmem:[#allocation5 + $0x68] sm:$0xf]
    %v90 = vld [vmem:[#allocation5 + $0x6c] sm:$0xf]
    %v91 = vld [vmem:[#allocation5 + $0x70] sm:$0xf]
    %v92 = vld [vmem:[#allocation5 + $0x74] sm:$0xf]
    %v93 = vld [vmem:[#allocation5 + $0x78] sm:$0xf]
    %v94 = vld [vmem:[#allocation5 + $0x7c] sm:$0xf]
    %v95 = vld [vmem:[#allocation5 + $0x80] sm:$0xf]
    %v96 = vld [vmem:[#allocation5 + $0x84] sm:$0xf]
    %v97 = vld [vmem:[#allocation5 + $0x88] sm:$0xf]
    %v98 = vld [vmem:[#allocation5 + $0x8c] sm:$0xf]
    %v99 = vld [vmem:[#allocation5 + $0x90] sm:$0xf]
    %v100 = vld [vmem:[#allocation5 + $0x94] sm:$0xf]
    %v101 = vld [vmem:[#allocation5 + $0x98] sm:$0xf]
    %v102 = vld [vmem:[#allocation5 + $0x9c] sm:$0xf]
    %v103 = vld [vmem:[#allocation5 + $0xa0] sm:$0xf]
    %v104 = vld [vmem:[#allocation5 + $0xa4] sm:$0xf]
    %v105 = vld [vmem:[#allocation5 + $0xa8] sm:$0xf]
    %v106 = vld [vmem:[#allocation5 + $0xac] sm:$0xf]
    %v107 = vld [vmem:[#allocation5 + $0xb0] sm:$0xf]
    %v108 = vld [vmem:[#allocation5 + $0xb4] sm:$0xf]
    %v109 = vld [vmem:[#allocation5 + $0xb8] sm:$0xf]
    %v110 = vld [vmem:[#allocation5 + $0xbc] sm:$0xf]
    %v111 = vld [vmem:[#allocation5 + $0xc0] sm:$0xf]
    %v112 = vld [vmem:[#allocation5 + $0xc4] sm:$0xf]
    %v113 = vld [vmem:[#allocation5 + $0xc8] sm:$0xf]
    %v114 = vld [vmem:[#allocation5 + $0xcc] sm:$0xf]
    %v115 = vld [vmem:[#allocation5 + $0xd0] sm:$0xf]
    %v116 = vld [vmem:[#allocation5 + $0xd4] sm:$0xf]
    %v117 = vld [vmem:[#allocation5 + $0xd8] sm:$0xf]
    %v118 = vld [vmem:[#allocation5 + $0xdc] sm:$0xf]
    %v119 = vld [vmem:[#allocation5 + $0xe0] sm:$0xf]
    %v120 = vld [vmem:[#allocation5 + $0xe4] sm:$0xf]
    %v121 = vld [vmem:[#allocation5 + $0xe8] sm:$0xf]
    %v122 = vld [vmem:[#allocation5 + $0xec] sm:$0xf]
    %v123 = vld [vmem:[#allocation5 + $0xf0] sm:$0xf]
    %v124 = vld [vmem:[#allocation5 + $0xf4] sm:$0xf]
    %v125 = vld [vmem:[#allocation5 + $0xf8] sm:$0xf]
    %v126 = vld [vmem:[#allocation5 + $0xfc] sm:$0xf]
    %v127 = vld [vmem:[%s2] sm:$0x1]
    %v129 = vperm.slane %v127, 0
    %v133 = vunpack.c.l.b16 %v61
    %v134 = vunpack.c.h.b16 %v61
    %v135 = vunpack.c.l.b16 %v62
    %v136 = vunpack.c.h.b16 %v62
    %v137 = vpack.c.b16 %v133, %v133
    %v138 = vpack.c.b16 %v134, %v134
    %v139 = vpack.c.b16 %v135, %v135
    %v140 = vpack.c.b16 %v136, %v136
    %v209 = vunpack.c.l.b16 %v63
    %v210 = vunpack.c.l.b16 %v64
    %v211 = vunpack.c.l.b16 %v65
    %v212 = vunpack.c.l.b16 %v66
    %v213 = vunpack.c.l.b16 %v67
    %v214 = vunpack.c.l.b16 %v68
    %v215 = vunpack.c.l.b16 %v69
    %v216 = vunpack.c.l.b16 %v70
    %v217 = vunpack.c.l.b16 %v71
    %v218 = vunpack.c.l.b16 %v72
    %v219 = vunpack.c.l.b16 %v73
    %v220 = vunpack.c.l.b16 %v74
    %v221 = vunpack.c.l.b16 %v75
    %v222 = vunpack.c.l.b16 %v76
    %v223 = vunpack.c.l.b16 %v77
    %v224 = vunpack.c.l.b16 %v78
    %v225 = vunpack.c.l.b16 %v79
    %v226 = vunpack.c.l.b16 %v80
    %v227 = vunpack.c.l.b16 %v81
    %v228 = vunpack.c.l.b16 %v82
    %v229 = vunpack.c.l.b16 %v83
    %v230 = vunpack.c.l.b16 %v84
    %v231 = vunpack.c.l.b16 %v85
    %v232 = vunpack.c.l.b16 %v86
    %v233 = vunpack.c.l.b16 %v87
    %v234 = vunpack.c.l.b16 %v88
    %v235 = vunpack.c.l.b16 %v89
    %v236 = vunpack.c.l.b16 %v90
    %v237 = vunpack.c.l.b16 %v91
    %v238 = vunpack.c.l.b16 %v92
    %v239 = vunpack.c.l.b16 %v93
    %v240 = vunpack.c.l.b16 %v94
    %v241 = vunpack.c.l.b16 %v95
    %v242 = vunpack.c.l.b16 %v96
    %v243 = vunpack.c.l.b16 %v97
    %v244 = vunpack.c.l.b16 %v98
    %v245 = vunpack.c.l.b16 %v99
    %v246 = vunpack.c.l.b16 %v100
    %v247 = vunpack.c.l.b16 %v101
    %v248 = vunpack.c.l.b16 %v102
    %v249 = vunpack.c.l.b16 %v103
    %v250 = vunpack.c.l.b16 %v104
    %v251 = vunpack.c.l.b16 %v105
    %v252 = vunpack.c.l.b16 %v106
    %v253 = vunpack.c.l.b16 %v107
    %v254 = vunpack.c.l.b16 %v108
    %v255 = vunpack.c.l.b16 %v109
    %v256 = vunpack.c.l.b16 %v110
    %v257 = vunpack.c.l.b16 %v111
    %v258 = vunpack.c.l.b16 %v112
    %v259 = vunpack.c.l.b16 %v113
    %v260 = vunpack.c.l.b16 %v114
    %v261 = vunpack.c.l.b16 %v115
    %v262 = vunpack.c.l.b16 %v116
    %v263 = vunpack.c.l.b16 %v117
    %v264 = vunpack.c.l.b16 %v118
    %v265 = vunpack.c.l.b16 %v119
    %v266 = vunpack.c.l.b16 %v120
    %v267 = vunpack.c.l.b16 %v121
    %v268 = vunpack.c.l.b16 %v122
    %v269 = vunpack.c.l.b16 %v123
    %v270 = vunpack.c.l.b16 %v124
    %v271 = vunpack.c.l.b16 %v125
    %v272 = vunpack.c.l.b16 %v126
    %v273 = vpack.c.b16 %v210, %v209
    %v274 = vpack.c.b16 %v212, %v211
    %v275 = vpack.c.b16 %v214, %v213
    %v276 = vpack.c.b16 %v216, %v215
    %v277 = vpack.c.b16 %v218, %v217
    %v278 = vpack.c.b16 %v220, %v219
    %v279 = vpack.c.b16 %v222, %v221
    %v280 = vpack.c.b16 %v224, %v223
    %v281 = vpack.c.b16 %v226, %v225
    %v282 = vpack.c.b16 %v228, %v227
    %v283 = vpack.c.b16 %v230, %v229
    %v284 = vpack.c.b16 %v232, %v231
    %v285 = vpack.c.b16 %v234, %v233
    %v286 = vpack.c.b16 %v236, %v235
    %v287 = vpack.c.b16 %v238, %v237
    %v288 = vpack.c.b16 %v240, %v239
    %v289 = vpack.c.b16 %v242, %v241
    %v290 = vpack.c.b16 %v244, %v243
    %v291 = vpack.c.b16 %v246, %v245
    %v292 = vpack.c.b16 %v248, %v247
    %v293 = vpack.c.b16 %v250, %v249
    %v294 = vpack.c.b16 %v252, %v251
    %v295 = vpack.c.b16 %v254, %v253
    %v296 = vpack.c.b16 %v256, %v255
    %v297 = vpack.c.b16 %v258, %v257
    %v298 = vpack.c.b16 %v260, %v259
    %v299 = vpack.c.b16 %v262, %v261
    %v300 = vpack.c.b16 %v264, %v263
    %v301 = vpack.c.b16 %v266, %v265
    %v302 = vpack.c.b16 %v268, %v267
    %v303 = vpack.c.b16 %v270, %v269
    %v304 = vpack.c.b16 %v272, %v271
    %337 = vmatpush.bf16.msra.mxu0 %v280
    %338 = vmatpush.bf16.msra.mxu0 %v279
    %339 = vmatpush.bf16.msra.mxu0 %v278
    %340 = vmatpush.bf16.msra.mxu0 %v277
    %341 = vmatpush.bf16.msra.mxu0 %v276
    %342 = vmatpush.bf16.msra.mxu0 %v275
    %343 = vmatpush.bf16.msra.mxu0 %v274
    %344 = vmatpush.bf16.msra.mxu0 %v273
    %345 = vmatmul.bf16.gmra.mxu0 %v137
    %v346 = vpop.f32.mrf.mxu0
    %v347 = vadd.f32 %v129, %v346
    %v348 = vpop.f32.mrf.mxu0
    %349 = vdwg.mxu0
    %350 = vmatpush.bf16.msra.mxu0 %v288
    %351 = vmatpush.bf16.msra.mxu0 %v287
    %352 = vmatpush.bf16.msra.mxu0 %v286
    %353 = vmatpush.bf16.msra.mxu0 %v285
    %354 = vmatpush.bf16.msra.mxu0 %v284
    %355 = vmatpush.bf16.msra.mxu0 %v283
    %356 = vmatpush.bf16.msra.mxu0 %v282
    %357 = vmatpush.bf16.msra.mxu0 %v281
    %358 = vmatmul.bf16.gmra.mxu0 %v138
    %v359 = vpop.f32.mrf.mxu0
    %v360 = vadd.f32 %v347, %v359
    %v361 = vpop.f32.mrf.mxu0
    %362 = vdwg.mxu0
    %363 = vmatpush.bf16.msra.mxu0 %v296
    %364 = vmatpush.bf16.msra.mxu0 %v295
    %365 = vmatpush.bf16.msra.mxu0 %v294
    %366 = vmatpush.bf16.msra.mxu0 %v293
    %367 = vmatpush.bf16.msra.mxu0 %v292
    %368 = vmatpush.bf16.msra.mxu0 %v291
    %369 = vmatpush.bf16.msra.mxu0 %v290
    %370 = vmatpush.bf16.msra.mxu0 %v289
    %371 = vmatmul.bf16.gmra.mxu0 %v139
    %v372 = vpop.f32.mrf.mxu0
    %v373 = vadd.f32 %v360, %v372
    %v374 = vpop.f32.mrf.mxu0
    %375 = vdwg.mxu0
    %376 = vmatpush.bf16.msra.mxu0 %v304
    %377 = vmatpush.bf16.msra.mxu0 %v303
    %378 = vmatpush.bf16.msra.mxu0 %v302
    %379 = vmatpush.bf16.msra.mxu0 %v301
    %380 = vmatpush.bf16.msra.mxu0 %v300
    %381 = vmatpush.bf16.msra.mxu0 %v299
    %382 = vmatpush.bf16.msra.mxu0 %v298
    %383 = vmatpush.bf16.msra.mxu0 %v297
    %384 = vmatmul.bf16.gmra.mxu0 %v140
    %v385 = vpop.f32.mrf.mxu0
    %v386 = vadd.f32 %v373, %v385
    %v387 = vpop.f32.mrf.mxu0
    %388 = vdwg.mxu0
    %v389 = vld [vmem:[#allocation7] sm:$0xff]
    %v390 = vadd.f32 %v386, %v389
    %391 = vst [vmem:[#allocation8] sm:$0xff] %v390
    // Predicated region
    $region30: #{tpu_custom_call.1} parent=1 // pred_check
      _
    $region31: #{tpu_custom_call.1} parent=1 // pred_check_branch
      %393 = sbr.rel (0) target = $region33
    $region32: #{tpu_custom_call.1} parent=1 // pred_region
      %395 = vsyncadd [#allocation4], 0
      %s397 = sshll.u32 [#allocation8], 4
      %s398 = int_to_ptr.vmem [resolvable:$true] %s397
      %s399 = sshll.u32 %s4, 4
      %s400 = int_to_ptr.hbm [resolvable:$true] %s399
      %402 = dma.vmem_to_hbm [thread:$0]  %s398, 128, %s400, [#allocation4]
    $region33: #{tpu_custom_call.1} parent=1 // pred_fallthru
      _
    // Predicated region
    $region34: #{tpu_custom_call.1} parent=1 // pred_check
      _
    $region35: #{tpu_custom_call.1} parent=1 // pred_check_branch
      %404 = sbr.rel (0) target = $region37
    $region36: #{tpu_custom_call.1} parent=1 // pred_region
      %406 = dma.done [#allocation4], 128
    $region37: #{tpu_custom_call.1} parent=1 // pred_fallthru
      _
    %407 = vsyncpa [#allocation3], 1
    %408 = vsyncpa [#allocation6], 1
    %409 = vsyncpa [#allocation4], 1

</llo_original>
